<compile_context>
chip_gen: v7x
topology: tpu7x:2x2x1
jax: 0.10.0
libtpu: 0.0.40
codegen_flags: <defaults>
</compile_context>

<pallas_src>
import functools

import jax
import jax.numpy as jnp
from jax.experimental import pallas as pl
from jax.experimental.pallas import tpu as pltpu


def _round_up(x, m):
    return -(-x // m) * m


def _sublane_multiple(itemsize):
    # 32-bit types tile sublanes in 8s; bf16 packs 16; int8 packs 32.
    return 8 * max(1, 4 // itemsize)


def _vmem_budget_bytes():
    """Generation-aware VMEM budget for the (double-buffered) blocks.

    Kept under every generation's *default* scoped-VMEM limit (16 MiB on v5e,
    32 MiB on v6e/v7x) so no vmem_limit_bytes override is required, while
    being smaller on v7x (64 MiB physical VMEM) than on v5e/v6e (128 MiB).
    """
    try:
        cap = pltpu.get_tpu_info().vmem_capacity_bytes
    except Exception:  # not on TPU / API unavailable at trace time
        cap = 64 << 20
    return min(12 << 20, max(2 << 20, cap // 8))


def _pick_planes_per_block(nc, h_out, w_out, w, itemsize, staged,
                           vmem_budget_bytes, min_grid_steps=4):
    """Planes per grid step, based on padded VMEM footprint (not logical bytes).

    - No exact-divisor requirement: caller uses grid = cdiv(nc, planes) and a
      static tail block, so awkward/prime nc never degenerates to 1-plane
      blocks.
    - Keeps >= min_grid_steps grid steps (>= 2 per v7x TensorCore) so the
      output writeback of step i-1 overlaps step i's input DMA + copy.
    """
    sub = _sublane_multiple(itemsize)
    out_plane_vmem = _round_up(h_out, sub) * _round_up(w_out, 128) * itemsize
    per_plane = 2 * out_plane_vmem                      # double-buffered output
    if staged:
        per_plane += _round_up(h_out, sub) * _round_up(w, 128) * itemsize
    cap = max(1, vmem_budget_bytes // per_plane)
    per_step = max(1, -(-nc // min_grid_steps))
    return max(1, min(nc, cap, per_step))


def _crop_kernel(x_hbm, o_ref, *scratch,
                 planes, tail, r, c, w, h_out, w_out, staged):
    # x_hbm : full (N*C, H, W) input left in HBM (no auto-DMA).
    # o_ref : (planes, h_out, w_out) VMEM output block for this grid step.
    if staged:
        buf, sem = scratch          # buf: (planes, h_out, w) staging scratch
    else:
        (sem,) = scratch
        buf = None

    i = pl.program_id(0)
    start = pl.multiple_of(i * planes, planes)

    if staged:
        col = pl.ds(0, w)           # full-width rows: one big burst per plane
    else:
        col = pl.ds(c, w_out)       # exact window: zero wasted bytes

    def dst_for(n_planes):
        base = buf if staged else o_ref
        return base if n_planes == planes else base.at[pl.ds(0, n_planes)]

    def dma(n_planes):
        cp = pltpu.make_async_copy(
            x_hbm.at[pl.ds(start, n_planes), pl.ds(r, h_out), col],
            dst_for(n_planes),
            sem,
        )
        cp.start()
        cp.wait()

    if tail == planes:
        # Block size divides N*C exactly: single DMA, no branching.
        dma(planes)
    else:
        last = pl.num_programs(0) - 1

        @pl.when(i < last)
        def _():
            dma(planes)

        @pl.when(i == last)
        def _():
            dma(tail)   # tail is a *static* size -> legal DMA shape

    if staged:
        # Column crop as an in-VMEM lane slice.  For the tail block the
        # planes >= tail hold stale data, but those rows of the output block
        # are clipped by the boundary-block writeback and never reach HBM.
        o_ref[...] = buf[:, :, c:c + w_out]


def crop_layer(x: jax.Array, crop_set=(-1, -1)) -> jax.Array:
    rows_to_crop = -int(crop_set[0])
    cols_to_crop = -int(crop_set[1])
    # PyTorch with crop == 0 returns an empty tensor; intentionally unsupported.
    assert rows_to_crop > 0 and cols_to_crop > 0, (
        "CropLayer: zero crop produces an empty tensor in PyTorch; "
        "only strictly-positive crops are supported."
    )

    n, ch, h, w = x.shape
    h_out = h - 2 * rows_to_crop
    w_out = w - 2 * cols_to_crop
    assert h_out > 0 and w_out > 0

    nc = n * ch
    x_flat = x.reshape(nc, h, w)
    itemsize = x.dtype.itemsize

    # Staged (full-width-row) source DMA iff strided per-row reads would be
    # sub-512 B bursts AND the extra read factor w/w_out is cheaper than the
    # efficiency loss (both reduce to: full row < 512 B).
    staged = (w * itemsize) < 512

    planes = _pick_planes_per_block(
        nc, h_out, w_out, w, itemsize, staged, _vmem_budget_bytes())
    nblocks = -(-nc // planes)
    tail = nc - (nblocks - 1) * planes

    scratch_shapes = []
    if staged:
        scratch_shapes.append(pltpu.VMEM((planes, h_out, w), x.dtype))
    scratch_shapes.append(pltpu.SemaphoreType.DMA(()))

    kernel = functools.partial(
        _crop_kernel,
        planes=planes, tail=tail,
        r=rows_to_crop, c=cols_to_crop,
        w=w, h_out=h_out, w_out=w_out,
        staged=staged,
    )

    out_flat = pl.pallas_call(
        kernel,
        out_shape=jax.ShapeDtypeStruct((nc, h_out, w_out), x.dtype),
        grid_spec=pltpu.PrefetchScalarGridSpec(
            num_scalar_prefetch=0,
            grid=(nblocks,),
            in_specs=[
                # Leave the input in HBM; only the needed window crosses the
                # HBM bus (plus <=(w/w_out - 1)x on the staged path).
                pl.BlockSpec(memory_space=pl.ANY),
            ],
            # Full (h_out, w_out) extent -> satisfies the (8,128) rule and
            # gives a contiguous per-block HBM writeback.
            out_specs=pl.BlockSpec(
                (planes, h_out, w_out), lambda i: (i, 0, 0)
            ),
            scratch_shapes=scratch_shapes,
        ),
        compiler_params=pltpu.CompilerParams(
            dimension_semantics=("parallel",),
        ),
    )(x_flat)

    return out_flat.reshape(n, ch, h_out, w_out)


def _crop_ref(x, crop_set=(-1, -1)):
    r = -crop_set[0]
    c = -crop_set[1]
    return x[:, :, r:-r, c:-c]


if __name__ == "__main__":
    key = jax.random.PRNGKey(0)
    x = jax.random.normal(key, (2, 4, 16, 16), dtype=jnp.float32)

    crop_set = (-1, -1)
    out = jax.block_until_ready(crop_layer(x, crop_set))

    ref = _crop_ref(x, crop_set)
    assert out.shape == ref.shape == (2, 4, 14, 14), out.shape
    assert jnp.array_equal(out, ref), "mismatch vs reference crop"

    print("KERNEL_OK")
</pallas_src>

<mosaic_0001>
module attributes {stable_mosaic.version = 11 : i64} {
  func.func @_crop_kernel(%arg0: i32, %arg1: memref<8x16x16xf32, #tpu.memory_space<any>>, %arg2: memref<2x14x14xf32, #tpu.memory_space<vmem>>, %arg3: memref<2x14x16xf32, #tpu.memory_space<vmem>>, %arg4: memref<!tpu.dma_semaphore, #tpu.memory_space<semaphore_mem>>) attributes {dimension_semantics = [#tpu.dimension_semantics<parallel>], iteration_bounds = array<i64: 4>, scalar_prefetch = 0 : i64, scratch_operands = 2 : i64, tpu.core_type = #tpu.core_type<tc>, window_params = [{}, {transform_indices = @transform_1, window_bounds = array<i64: 2, 14, 14>}]} {
    %c2_i32 = arith.constant 2 : i32
    %0 = arith.muli %arg0, %c2_i32 : i32
    %1 = tpu.assume_multiple %0, 2 : i32
    %c1_i32 = arith.constant 1 : i32
    %c0_i32 = arith.constant 0 : i32
    %2 = tpu.memref_slice %arg1[%1, %c1_i32, %c0_i32] : memref<8x16x16xf32, #tpu.memory_space<any>> -> memref<2x14x16xf32, #tpu.memory_space<any>>
    tpu.enqueue_dma source(%2 : memref<2x14x16xf32, #tpu.memory_space<any>>) target(%arg3 : memref<2x14x16xf32, #tpu.memory_space<vmem>>) target_semaphore(%arg4 : memref<!tpu.dma_semaphore, #tpu.memory_space<semaphore_mem>>)
    %c1_i32_0 = arith.constant 1 : i32
    %c0_i32_1 = arith.constant 0 : i32
    %3 = tpu.memref_slice %arg1[%1, %c1_i32_0, %c0_i32_1] : memref<8x16x16xf32, #tpu.memory_space<any>> -> memref<2x14x16xf32, #tpu.memory_space<any>>
    tpu.wait_dma2 semaphore(%arg4 : memref<!tpu.dma_semaphore, #tpu.memory_space<semaphore_mem>>) src(%3 : memref<2x14x16xf32, #tpu.memory_space<any>>) dst(%arg3 : memref<2x14x16xf32, #tpu.memory_space<vmem>>)
    %c0 = arith.constant 0 : index
    %c0_2 = arith.constant 0 : index
    %c1 = arith.constant 1 : index
    %4 = vector.load %arg3[%c0, %c0_2, %c1] : memref<2x14x16xf32, #tpu.memory_space<vmem>>, vector<2x14x14xf32>
    %c0_3 = arith.constant 0 : index
    %c0_4 = arith.constant 0 : index
    %c0_5 = arith.constant 0 : index
    %5 = vector.load %arg2[%c0_3, %c0_4, %c0_5] : memref<2x14x14xf32, #tpu.memory_space<vmem>>, vector<2x14x14xf32>
    tpu.vector_store %arg2[%c0_3, %c0_4, %c0_5], %4 {strides = array<i32>} : memref<2x14x14xf32, #tpu.memory_space<vmem>>, vector<2x14x14xf32>,
    return
  }
  func.func @transform_1(%arg0: i32) -> (i32, i32, i32) {
    %c0_i32 = arith.constant 0 : i32
    %c0_i32_0 = arith.constant 0 : i32
    %c0_i32_1 = arith.constant 0 : i32
    return %arg0, %c0_i32, %c0_i32_0 : i32, i32, i32
  }
}

</mosaic_0001>

<llo_original>
// kernel: tpu_custom_call.1
$region0: #{tpu_custom_call.1}
  #allocation0 [shape = 'u32[]', space=smem, size = 0x4, offset = 0x4, fixed_abs, tag = 'smem constant byte address 0x4 - core index']
  #allocation1 [shape = 'u32[144,128]{1,0:T(1,128)}', space=vmem, size = 0x12000, scoped, tag = 'internal scratch']
  #allocation2 [shape = 'f32[2,14,16]{2,1,0:T(8,128)}', space=vmem, size = 0x4000, scoped, tag = 'scratch operand']
  #allocation3 [shape = 's32[1]{0}', space=sflag, size = 0x4, scoped, tag = 'scratch operand']
  #allocation4 [shape = 's32[]', space=sflag, size = 0x4, offset = 0, fixed_abs, tag = 'sflag constant byte address 0x0 - dummy sync flag']
  %s0 = inlined_call_operand.hbm [shape: f32[8,16,16], index: 0, kind: input, shape index: {}]
  %s1 = inlined_call_operand.vmem [shape: f32[8,14,14], index: 1, kind: output, shape index: {}]
  %s2 = sld [smem:[#allocation0]]
  $region25: #{tpu_custom_call.1} parent=0
    _
  %s4 = ssub.s32 1, %s2
  %s5 = scalar_select 0, %s4, %s2
  loop: start=0, step=1, limit=5
  $region2: #{tpu_custom_call.1} parent=0 // loop_pre_header
    _
  $region3: #{tpu_custom_call.1} parent=0 // loop_header
    %s7 = sphi 0, %s11
    %p8 = scmp.ge.s32.totalorder %s7, 5
    %s16 = sphi 0, %s18
    %s19 = sphi 0, %s16
    %s29 = sphi 0, %s19
  $region4: #{tpu_custom_call.1} parent=0 // loop_header_branch
    %10 = sbr.rel (%p8) target = $region8
  $region5: #{tpu_custom_call.1} parent=0 // loop_body
    %s12 = ssub.s32 %s7, 1
    %s13 = sadd.s32 %s7, 1
    %s14 = ssub.s32 %s7, %s13
    %p15 = scmp.eq.s32.totalorder %s14, 0
    %s17 = sadd.s32 %s16, 1
    %s18 = scalar_select %p15, %s16, %s17
    %p20 = pneg %p15
    %p21 = scmp.eq.s32.totalorder %s7, 3
    %p22 = por %p20, %p21
    %p23 = scmp.ne.s32.totalorder %s16, %s19
    %p24 = scmp.eq.s32.totalorder %s7, 0
    %p25 = por %p23, %p24
    %p26 = scmp.ne.s32.totalorder %s16, %s19
    %p27 = scmp.eq.s32.totalorder %s12, 3
    %p28 = por %p26, %p27
    %p30 = scmp.ne.s32.totalorder %s19, %s29
    %p31 = scmp.eq.s32.totalorder %s12, 0
    %p32 = por %p30, %p31
    %p33 = scmp.lt.s32.totalorder %s7, 4
    // Predicated region
    $region9: #{tpu_custom_call.1} parent=5 // pred_check
      %p34 = pneg %p33
    $region10: #{tpu_custom_call.1} parent=5 // pred_check_branch
      %36 = sbr.rel (%p34) target = $region12
    $region11: #{tpu_custom_call.1} parent=5 // pred_region
      %p37 = pneg %p25
      %p38 = pneg %p22
      %s39 = smul.u32 2, %s7
      %p40 = scmp.lt.s32.totalorder %s39, 7
      %s41 = scalar_select %p40, %s39, 7
      %s42 = smul.addr %s41, 2
      %s43 = smul.addr %s42, 8
      %s44 = scalar_lea.vmem %s1, %s43
      %s45 = smul.u32 2, %s7
      %p46 = scmp.lt.s32.totalorder %s45, 7
      %s47 = scalar_select %p46, %s45, 7
      %s48 = smul.addr %s47, 2
      %s49 = smul.addr %s48, 8
      %s50 = scalar_lea.vmem %s1, %s49
      %s51 = smul.u32 2, %s7
      %s52 = smul.u32 %s7, 2
      %s53 = smul.u32 %s52, 16
      %s54 = sadd.s32 1, %s53
      %s55 = smul.addr %s54, 16
      %s56 = scalar_lea.hbm %s0, %s55
      %s58 = sshll.u32 [#allocation2], 4
      %s59 = int_to_ptr.vmem [resolvable:$true] %s58
      %61 = dma.hbm_to_vmem [thread:$0]  %s56, 448, %s59, [#allocation3], 256, 256, 14
      %s62 = smul.u32 2, 14
      %s63 = smul.u32 %s62, 1
      %s64 = sshll.u32 %s63, 4
      %65 = dma.done [#allocation3], %s64
      %v66 = vld [vmem:[#allocation2] sm:$0xff]
      %v67 = vld [vmem:[#allocation2 + $0x8] sm:$0x3f]
      %v68 = vld [vmem:[#allocation2 + $0x10] sm:$0xff]
      %v69 = vld [vmem:[#allocation2 + $0x18] sm:$0x3f]
      %74 = vrot.lane.b32.xlu0 %v66, 127
      %v75 = vpop.permute.xlu0 %74
      %76 = vrot.lane.b32.xlu0 %v67, 127
      %v77 = vpop.permute.xlu0 %76
      %78 = vrot.lane.b32.xlu0 %v68, 127
      %v79 = vpop.permute.xlu0 %78
      %80 = vrot.lane.b32.xlu0 %v69, 127
      %v81 = vpop.permute.xlu0 %80
      %vm86 = vcmask 113664
      %87 = vst.msk [vmem:[%s50] sm:$0xff] %vm86, %v75
      %vm88 = vcmask 111616
      %89 = vst.msk [vmem:[%s50 + $0x8] sm:$0x3f] %vm88, %v77
      %90 = vst.msk [vmem:[%s50 + $0x10] sm:$0xff] %vm86, %v79
      %91 = vst.msk [vmem:[%s50 + $0x18] sm:$0x3f] %vm88, %v81
      %s92 = smul.u32 2, %s7
      %p93 = scmp.lt.s32.totalorder %s92, 7
      %s94 = scalar_select %p93, %s92, 7
      %s95 = smul.addr %s94, 2
      %s96 = smul.addr %s95, 8
      %s97 = scalar_lea.vmem %s1, %s96
      // Predicated region
      $region13: #{tpu_custom_call.1} parent=11 // pred_check
        %p98 = pneg %p22
      $region14: #{tpu_custom_call.1} parent=11 // pred_check_branch
        %100 = sbr.rel (%p98) target = $region16
      $region15: #{tpu_custom_call.1} parent=11 // pred_region
        %s101 = smul.u32 2, %s7
      $region16: #{tpu_custom_call.1} parent=11 // pred_fallthru
        _
    $region12: #{tpu_custom_call.1} parent=5 // pred_fallthru
      _
    %p102 = scmp.le.s32.totalorder 1, %s7
    // Predicated region
    $region17: #{tpu_custom_call.1} parent=5 // pred_check
      %p103 = pneg %p102
    $region18: #{tpu_custom_call.1} parent=5 // pred_check_branch
      %105 = sbr.rel (%p103) target = $region20
    $region19: #{tpu_custom_call.1} parent=5 // pred_region
      %s106 = ssub.s32 %s7, 1
      // Predicated region
      $region21: #{tpu_custom_call.1} parent=19 // pred_check
        %p107 = pneg %p28
      $region22: #{tpu_custom_call.1} parent=19 // pred_check_branch
        %109 = sbr.rel (%p107) target = $region24
      $region23: #{tpu_custom_call.1} parent=19 // pred_region
        %s110 = smul.u32 2, %s12
        %p111 = scmp.lt.s32.totalorder %s110, 7
        %s112 = scalar_select %p111, %s110, 7
        %s113 = smul.addr %s112, 2
        %s114 = smul.addr %s113, 8
        %s115 = scalar_lea.vmem %s1, %s114
      $region24: #{tpu_custom_call.1} parent=19 // pred_fallthru
        _
    $region20: #{tpu_custom_call.1} parent=5 // pred_fallthru
      _
  $region6: #{tpu_custom_call.1} parent=0 // loop_footer
    %s11 = sadd.s32 1, %s7
  $region7: #{tpu_custom_call.1} parent=0 // loop_footer_branch
    %6 = sbr.rel target = $region3
  $region8: #{tpu_custom_call.1} parent=0 // loop_exit
    _
  %116 = vsyncmov [#allocation3]
  %s117 = vpop.sfrf %116
  %p118 = scmp.eq.s32.totalorder %s117, 0
  %p119 = pneg %p118
  %121 = shalt.err (%p119)

</llo_original>
